<compile_context>
chip_gen: v6e
topology: v6e:2x2x1
jax: 0.10.0
libtpu: 0.0.40
codegen_flags: <defaults>
</compile_context>

<pallas_src>
import functools

import jax
import jax.numpy as jnp
from jax.experimental import pallas as pl
from jax.experimental.pallas import tpu as pltpu


_LANES = 512       # lane-dense last dim (multiple of 128)
_TILE_ROWS = 512   # sublane tile (multiple of 8 / 16 / 32 for packed dtypes)


def _actlog_kernel(x_ref, o_ref, *, eps):
    x = x_ref[...]
    # Compute clamp + log in f32: keeps the eps threshold exact for
    # low-precision inputs and avoids bf16 EUP emulation on v5e.
    xf = x.astype(jnp.float32)
    y = jnp.log(jnp.maximum(xf, jnp.float32(eps)))
    o_ref[...] = y.astype(o_ref.dtype)


def _actlog_pallas(x_flat: jax.Array, eps: float) -> jax.Array:
    n = x_flat.shape[0]
    dtype = x_flat.dtype

    # Pad to a multiple of the lane width with 1.0 (log(1) = 0, no NaN/Inf).
    padded = pl.cdiv(n, _LANES) * _LANES
    if padded != n:
        x_flat = jnp.concatenate(
            [x_flat, jnp.ones((padded - n,), dtype=dtype)])
    rows = padded // _LANES
    x2 = x_flat.reshape(rows, _LANES)

    # Full-extent block when the slab is smaller than one tile (exempt from the
    # (8,128) divisibility rule); otherwise a 512-row tile (~1 MiB f32).
    tile_rows = min(_TILE_ROWS, rows)
    grid = (pl.cdiv(rows, tile_rows),)

    kernel = functools.partial(_actlog_kernel, eps=eps)

    itemsize = jnp.dtype(dtype).itemsize
    cost = pl.CostEstimate(
        flops=n,                       # the max/compare
        transcendentals=n,             # the log
        bytes_accessed=2 * n * itemsize,
    )

    out2 = pl.pallas_call(
        kernel,
        out_shape=jax.ShapeDtypeStruct((rows, _LANES), dtype),
        grid_spec=pltpu.PrefetchScalarGridSpec(
            num_scalar_prefetch=0,
            grid=grid,
            in_specs=[pl.BlockSpec((tile_rows, _LANES), lambda i: (i, 0))],
            out_specs=pl.BlockSpec((tile_rows, _LANES), lambda i: (i, 0)),
        ),
        compiler_params=pltpu.CompilerParams(
            dimension_semantics=("parallel",),
        ),
        cost_estimate=cost,
    )(x2)

    return out2.reshape(padded)[:n]


def actlog(x: jax.Array, eps: float = 1e-6, *,
           min_pallas_elems: int = 1 << 15) -> jax.Array:
    """Pallas equivalent of ActLog.forward: log(clamp(x, min=eps))."""
    if x.size == 0 or x.size < min_pallas_elems:
        # Tiny (or empty) activations: custom-call + pipeline overhead dwarfs
        # the work; let XLA's fused elementwise handle it.
        return jnp.log(jnp.maximum(x, jnp.asarray(eps, dtype=x.dtype)))

    orig_shape = x.shape
    y_flat = _actlog_pallas(x.reshape(-1), eps)
    return y_flat.reshape(orig_shape)


if __name__ == "__main__":
    key = jax.random.PRNGKey(0)
    # Small NCHW input consistent with ShallowConvNet-style activations.
    x = jax.random.normal(key, (2, 4, 16, 16), dtype=jnp.float32)

    # Force the Pallas path so the kernel itself is exercised at this size.
    y = actlog(x, eps=1e-6, min_pallas_elems=0)
    y = jax.block_until_ready(y)

    # Reference (same semantics as torch.log(torch.clamp(x, min=eps))).
    y_ref = jnp.log(jnp.maximum(x, jnp.float32(1e-6)))
    assert y.shape == x.shape and y.dtype == x.dtype
    assert jnp.allclose(y, y_ref, atol=1e-6, rtol=1e-6), "mismatch vs reference"

    # Also check the small-input fallback path matches.
    y_fallback = jax.block_until_ready(actlog(x, eps=1e-6))
    assert jnp.allclose(y_fallback, y_ref, atol=1e-6, rtol=1e-6)

    print("KERNEL_OK")
</pallas_src>

<mosaic_0001>
module attributes {stable_mosaic.version = 11 : i64} {
  func.func @_actlog_kernel(%arg0: i32, %arg1: memref<4x512xf32, #tpu.memory_space<vmem>>, %arg2: memref<4x512xf32, #tpu.memory_space<vmem>>) attributes {dimension_semantics = [#tpu.dimension_semantics<parallel>], iteration_bounds = array<i64: 1>, scalar_prefetch = 0 : i64, scratch_operands = 0 : i64, tpu.core_type = #tpu.core_type<tc>, window_params = [{transform_indices = @transform_0, window_bounds = array<i64: 4, 512>}, {transform_indices = @transform_1, window_bounds = array<i64: 4, 512>}]} {
    %c0 = arith.constant 0 : index
    %c0_0 = arith.constant 0 : index
    %0 = vector.load %arg1[%c0, %c0_0] : memref<4x512xf32, #tpu.memory_space<vmem>>, vector<4x512xf32>
    %cst = arith.constant 9.99999997E-7 : f32
    %1 = vector.broadcast %cst : f32 to vector<4x512xf32>
    %2 = arith.maximumf %0, %1 : vector<4x512xf32>
    %3 = math.log %2 : vector<4x512xf32>
    %c0_1 = arith.constant 0 : index
    %c0_2 = arith.constant 0 : index
    %4 = vector.load %arg2[%c0_1, %c0_2] : memref<4x512xf32, #tpu.memory_space<vmem>>, vector<4x512xf32>
    tpu.vector_store %arg2[%c0_1, %c0_2], %3 {strides = array<i32>} : memref<4x512xf32, #tpu.memory_space<vmem>>, vector<4x512xf32>,
    return
  }
  func.func @transform_0(%arg0: i32) -> (i32, i32) {
    %c0_i32 = arith.constant 0 : i32
    %c0_i32_0 = arith.constant 0 : i32
    return %arg0, %c0_i32 : i32, i32
  }
  func.func @transform_1(%arg0: i32) -> (i32, i32) {
    %c0_i32 = arith.constant 0 : i32
    %c0_i32_0 = arith.constant 0 : i32
    return %arg0, %c0_i32 : i32, i32
  }
}

</mosaic_0001>

<llo_original>
// kernel: tpu_custom_call.1
$region0: #{tpu_custom_call.1}
  #allocation0 [shape = 'u32[]', space=smem, size = 0x4, offset = 0x4, fixed_abs, tag = 'smem constant byte address 0x4 - core index']
  #allocation1 [shape = 'u32[144,128]{1,0:T(1,128)}', space=vmem, size = 0x12000, scoped, tag = 'internal scratch']
  %s0 = inlined_call_operand.hbm [shape: f32[4,512], index: 0, kind: input, shape index: {}]
  %s1 = inlined_call_operand.hbm [shape: f32[4,512], index: 1, kind: output, shape index: {}]
  %s2 = sld [smem:[#allocation0]]
  $region18: #{tpu_custom_call.1} parent=0
    _
  %s4 = ssub.s32 1, %s2
  %s5 = scalar_select 0, %s4, %s2
  $region1: #{tpu_custom_call.1} parent=0
    #allocation2 [shape = 'u8[8192]{0}', space=vmem, size = 0x2000, scoped, tag = 'input window, operand 0, single buffered']
    #allocation3 [shape = 's32[1]{0}', space=sflag, size = 0x4, scoped, tag = 'scoped memory for tpu_custom_call.1']
    #allocation4 [shape = 's32[1]{0}', space=sflag, size = 0x4, scoped, tag = 'scoped memory for tpu_custom_call.1']
    #allocation5 [shape = 'u8[8192]{0}', space=vmem, size = 0x2000, scoped, tag = 'output window, operand 0, single buffered']
    %6 = vsyncpa [#allocation3], 0
    %7 = vsyncpa [#allocation4], 0
    // Predicated region
    $region2: #{tpu_custom_call.1} parent=1 // pred_check
      _
    $region3: #{tpu_custom_call.1} parent=1 // pred_check_branch
      %9 = sbr.rel (0) target = $region5
    $region4: #{tpu_custom_call.1} parent=1 // pred_region
      %s11 = ssub.s32 256, 256
      %12 = vsyncadd [#allocation3], %s11
      %s14 = sshll.u32 [#allocation2], 4
      %s15 = int_to_ptr.vmem [resolvable:$true] %s14
      %17 = dma.hbm_to_vmem [thread:$0]  %s0, 256, %s15, [#allocation3]
    $region5: #{tpu_custom_call.1} parent=1 // pred_fallthru
      _
    // Predicated region
    $region6: #{tpu_custom_call.1} parent=1 // pred_check
      _
    $region7: #{tpu_custom_call.1} parent=1 // pred_check_branch
      %19 = sbr.rel (0) target = $region9
    $region8: #{tpu_custom_call.1} parent=1 // pred_region
      %20 = dma.done [#allocation3], 256
    $region9: #{tpu_custom_call.1} parent=1 // pred_fallthru
      _
    %v21 = vld [vmem:[#allocation2] sm:$0xff]
    %v22 = vld [vmem:[#allocation2 + $0x8] sm:$0xff]
    %v23 = vmax.f32 %v21, 1e-06
    %v24 = vmax.f32 %v22, 1e-06
    %v25 = vlog2.pop %v23
    %v26 = vmul.f32 %v25, 0.6931472
    %v27 = vlog2.pop %v24
    %v28 = vmul.f32 %v27, 0.6931472
    %29 = vst [vmem:[#allocation5] sm:$0xff] %v26
    %30 = vst [vmem:[#allocation5 + $0x8] sm:$0xff] %v28
    // Predicated region
    $region10: #{tpu_custom_call.1} parent=1 // pred_check
      _
    $region11: #{tpu_custom_call.1} parent=1 // pred_check_branch
      %32 = sbr.rel (0) target = $region13
    $region12: #{tpu_custom_call.1} parent=1 // pred_region
      %s34 = ssub.s32 256, 256
      %35 = vsyncadd [#allocation4], %s34
      %s37 = sshll.u32 [#allocation5], 4
      %s38 = int_to_ptr.vmem [resolvable:$true] %s37
      %40 = dma.vmem_to_hbm [thread:$0]  %s38, 256, %s1, [#allocation4]
    $region13: #{tpu_custom_call.1} parent=1 // pred_fallthru
      _
    // Predicated region
    $region14: #{tpu_custom_call.1} parent=1 // pred_check
      _
    $region15: #{tpu_custom_call.1} parent=1 // pred_check_branch
      %42 = sbr.rel (0) target = $region17
    $region16: #{tpu_custom_call.1} parent=1 // pred_region
      %43 = dma.done [#allocation4], 256
    $region17: #{tpu_custom_call.1} parent=1 // pred_fallthru
      _
    %44 = vsyncpa [#allocation3], 1
    %45 = vsyncpa [#allocation4], 1

</llo_original>
